<compile_context>
chip_gen: v7x
topology: tpu7x:2x2x1
jax: 0.10.0
libtpu: 0.0.40
codegen_flags: <defaults>
</compile_context>

<pallas_src>
import jax
import jax.numpy as jnp
from jax.experimental import pallas as pl
from jax.experimental.pallas import tpu as pltpu

D_IN = 100    # logical in_features
D_OUT = 100   # logical out_features
D_PAD = 128   # lane-aligned padded output-feature width


def _fc4_kernel(x_ref, w_ref, b_ref, o_ref):
    # z = x @ W + b on the MXU, f32 accumulate, full f32 precision.
    z = jnp.dot(
        x_ref[...], w_ref[...],
        preferred_element_type=jnp.float32,
        precision=jax.lax.Precision.HIGHEST,
    ) + b_ref[...]
    # sigmoid(z) == 0.5 * tanh(0.5 * z) + 0.5  -> single EUP op per element.
    o_ref[...] = 0.5 * jnp.tanh(0.5 * z) + 0.5


def _pick_tb(B):
    """Batch tile.  Big tiles for big batches (amortize ~0.35us/step overhead,
    keep >=2 blocks so v7x's two TensorCores both get work); a single
    exact-size block for small batches (block dim == array dim is always a
    legal tile shape, no masking waste)."""
    if B >= 2048:
        return 1024
    if B >= 1024:
        return 512
    if B >= 512:
        return 256
    return B


def model_forward(x, params):
    """x: (B, 100) float32.
    params: dict from make_params(); uses the pre-padded 'w_pad' (100,128)
    and 'b_pad' (1,128)."""
    B = x.shape[0]
    tb = _pick_tb(B)
    n_blocks = pl.cdiv(B, tb)

    w_p = params["w_pad"]   # (D_IN, D_PAD), padded once at param creation
    b_p = params["b_pad"]   # (1, D_PAD)

    cost = pl.CostEstimate(
        flops=2 * B * D_IN * D_PAD,
        transcendentals=B * D_PAD,
        bytes_accessed=B * D_IN * 4 + B * D_PAD * 4 + D_IN * D_PAD * 4 + D_PAD * 4,
    )

    out_p = pl.pallas_call(
        _fc4_kernel,
        out_shape=jax.ShapeDtypeStruct((B, D_PAD), jnp.float32),
        grid_spec=pltpu.PrefetchScalarGridSpec(
            num_scalar_prefetch=0,
            grid=(n_blocks,),
            in_specs=[
                # x streams at native width (last dim == full array dim 100).
                pl.BlockSpec((tb, D_IN), lambda i: (i, 0)),
                # W and b stay resident (constant block index -> no re-DMA).
                pl.BlockSpec((D_IN, D_PAD), lambda i: (0, 0)),
                pl.BlockSpec((1, D_PAD), lambda i: (0, 0)),
            ],
            out_specs=pl.BlockSpec((tb, D_PAD), lambda i: (i, 0)),
        ),
        compiler_params=pltpu.CompilerParams(
            dimension_semantics=("parallel",),
        ),
        cost_estimate=cost,
    )(x, w_p, b_p)

    # Module contract is (B, 100); keep the kernel's stores lane-dense at 128
    # and slice here (cheaper than masked vst.msk partial stores in-kernel).
    return out_p[:, :D_OUT]


def make_params(key):
    """PyTorch-style uniform(-1/sqrt(fan_in), 1/sqrt(fan_in)) init.
    Weight stored pre-transposed as (in_features, out_features); the
    lane-padded copies used by the kernel are built ONCE here so the
    per-forward launch path has no pad ops."""
    kw, kb = jax.random.split(key)
    bound = 1.0 / jnp.sqrt(jnp.float32(D_IN))
    w = jax.random.uniform(kw, (D_IN, D_OUT), jnp.float32, -bound, bound)
    b = jax.random.uniform(kb, (1, D_OUT), jnp.float32, -bound, bound)
    w_pad = jnp.pad(w, ((0, 0), (0, D_PAD - D_OUT)))
    b_pad = jnp.pad(b, ((0, 0), (0, D_PAD - D_OUT)))
    return dict(w=w, b=b, w_pad=w_pad, b_pad=b_pad)


def _reference(x, p):
    z = jnp.dot(x, p["w"], precision=jax.lax.Precision.HIGHEST) + p["b"]
    return jax.nn.sigmoid(z)


if __name__ == "__main__":
    key = jax.random.PRNGKey(0)
    kx, kp = jax.random.split(key)

    B = 8
    x = jax.random.normal(kx, (B, D_IN), dtype=jnp.float32)
    params = make_params(kp)

    out = model_forward(x, params)
    out = jax.block_until_ready(out)

    ref = _reference(x, params)
    assert out.shape == (B, D_OUT), out.shape
    assert jnp.allclose(out, ref, atol=1e-5, rtol=1e-5), \
        float(jnp.max(jnp.abs(out - ref)))

    print("KERNEL_OK")
</pallas_src>

<mosaic_0001>
module attributes {stable_mosaic.version = 11 : i64} {
  func.func @_fc4_kernel(%arg0: i32, %arg1: memref<8x100xf32, #tpu.memory_space<vmem>>, %arg2: memref<100x128xf32, #tpu.memory_space<vmem>>, %arg3: memref<1x128xf32, #tpu.memory_space<vmem>>, %arg4: memref<8x128xf32, #tpu.memory_space<vmem>>) attributes {dimension_semantics = [#tpu.dimension_semantics<parallel>], iteration_bounds = array<i64: 1>, scalar_prefetch = 0 : i64, scratch_operands = 0 : i64, tpu.core_type = #tpu.core_type<tc>, window_params = [{transform_indices = @transform_0, window_bounds = array<i64: 8, 100>}, {pipeline_mode = #tpu.pipeline_mode<synchronous>, transform_indices = @transform_1, window_bounds = array<i64: 100, 128>}, {pipeline_mode = #tpu.pipeline_mode<synchronous>, transform_indices = @transform_2, window_bounds = array<i64: 1, 128>}, {transform_indices = @transform_3, window_bounds = array<i64: 8, 128>}]} {
    %c0 = arith.constant 0 : index
    %c0_0 = arith.constant 0 : index
    %0 = vector.load %arg1[%c0, %c0_0] : memref<8x100xf32, #tpu.memory_space<vmem>>, vector<8x100xf32>
    %c0_1 = arith.constant 0 : index
    %c0_2 = arith.constant 0 : index
    %1 = vector.load %arg2[%c0_1, %c0_2] : memref<100x128xf32, #tpu.memory_space<vmem>>, vector<100x128xf32>
    %cst = arith.constant dense<0.000000e+00> : vector<8x128xf32>
    %2 = tpu.matmul %0, %1, %cst {dimension_numbers = #tpu.dot_dimension_numbers<[1], [0], [0], [1], [0, 0, 1, 1], [], []>, precision = #tpu.contract_precision<fp32>} : vector<8x100xf32>, vector<100x128xf32>, vector<8x128xf32> -> vector<8x128xf32>
    %c0_3 = arith.constant 0 : index
    %c0_4 = arith.constant 0 : index
    %3 = vector.load %arg3[%c0_3, %c0_4] : memref<1x128xf32, #tpu.memory_space<vmem>>, vector<1x128xf32>
    %4 = vector.broadcast %3 : vector<1x128xf32> to vector<8x128xf32>
    %5 = arith.addf %2, %4 : vector<8x128xf32>
    %cst_5 = arith.constant 5.000000e-01 : f32
    %6 = vector.broadcast %cst_5 : f32 to vector<8x128xf32>
    %7 = arith.mulf %6, %5 : vector<8x128xf32>
    %8 = math.tanh %7 : vector<8x128xf32>
    %cst_6 = arith.constant 5.000000e-01 : f32
    %9 = vector.broadcast %cst_6 : f32 to vector<8x128xf32>
    %10 = arith.mulf %9, %8 : vector<8x128xf32>
    %cst_7 = arith.constant 5.000000e-01 : f32
    %11 = vector.broadcast %cst_7 : f32 to vector<8x128xf32>
    %12 = arith.addf %10, %11 : vector<8x128xf32>
    %c0_8 = arith.constant 0 : index
    %c0_9 = arith.constant 0 : index
    %13 = vector.load %arg4[%c0_8, %c0_9] : memref<8x128xf32, #tpu.memory_space<vmem>>, vector<8x128xf32>
    tpu.vector_store %arg4[%c0_8, %c0_9], %12 {strides = array<i32>} : memref<8x128xf32, #tpu.memory_space<vmem>>, vector<8x128xf32>,
    return
  }
  func.func @transform_0(%arg0: i32) -> (i32, i32) {
    %c0_i32 = arith.constant 0 : i32
    %c0_i32_0 = arith.constant 0 : i32
    return %arg0, %c0_i32 : i32, i32
  }
  func.func @transform_1(%arg0: i32) -> (i32, i32) {
    %c0_i32 = arith.constant 0 : i32
    %c0_i32_0 = arith.constant 0 : i32
    %c0_i32_1 = arith.constant 0 : i32
    return %c0_i32, %c0_i32_0 : i32, i32
  }
  func.func @transform_2(%arg0: i32) -> (i32, i32) {
    %c0_i32 = arith.constant 0 : i32
    %c0_i32_0 = arith.constant 0 : i32
    %c0_i32_1 = arith.constant 0 : i32
    return %c0_i32, %c0_i32_0 : i32, i32
  }
  func.func @transform_3(%arg0: i32) -> (i32, i32) {
    %c0_i32 = arith.constant 0 : i32
    %c0_i32_0 = arith.constant 0 : i32
    return %arg0, %c0_i32 : i32, i32
  }
}

</mosaic_0001>

<llo_original>
// kernel: tpu_custom_call.1
$region0: #{tpu_custom_call.1}
  #allocation0 [shape = 'u32[]', space=smem, size = 0x4, offset = 0x4, fixed_abs, tag = 'smem constant byte address 0x4 - core index']
  #allocation1 [shape = 'u32[144,128]{1,0:T(1,128)}', space=vmem, size = 0x12000, scoped, tag = 'internal scratch']
  %s0 = inlined_call_operand.hbm [shape: f32[8,100], index: 0, kind: input, shape index: {}]
  %s1 = inlined_call_operand.hbm [shape: f32[100,128], index: 1, kind: input, shape index: {}]
  %s2 = inlined_call_operand.vmem [shape: f32[1,128], index: 2, kind: input, shape index: {}]
  %s3 = inlined_call_operand.hbm [shape: f32[8,128], index: 3, kind: output, shape index: {}]
  %s4 = sld [smem:[#allocation0]]
  $region30: #{tpu_custom_call.1} parent=0
    _
  %s6 = ssub.s32 1, %s4
  %s7 = scalar_select 0, %s6, %s4
  $region1: #{tpu_custom_call.1} parent=0
    #allocation2 [shape = 'u8[4096]{0}', space=vmem, size = 0x1000, scoped, tag = 'input window, operand 0, single buffered']
    #allocation3 [shape = 's32[1]{0}', space=sflag, size = 0x4, scoped, tag = 'scoped memory for tpu_custom_call.1']
    #allocation4 [shape = 's32[1]{0}', space=sflag, size = 0x4, scoped, tag = 'scoped memory for tpu_custom_call.1']
    #allocation5 [shape = 'u8[53248]{0}', space=vmem, size = 0xd000, scoped, tag = 'input window, operand 1, single buffered']
    #allocation6 [shape = 's32[1]{0}', space=sflag, size = 0x4, scoped, tag = 'scoped memory for tpu_custom_call.1']
    #allocation7 [shape = 'u8[4096]{0}', space=vmem, size = 0x1000, scoped, tag = 'output window, operand 0, single buffered']
    %8 = vsyncpa [#allocation3], 0
    %9 = vsyncpa [#allocation6], 0
    %10 = vsyncpa [#allocation4], 0
    // Predicated region
    $region2: #{tpu_custom_call.1} parent=1 // pred_check
      _
    $region3: #{tpu_custom_call.1} parent=1 // pred_check_branch
      %12 = sbr.rel (0) target = $region5
    $region4: #{tpu_custom_call.1} parent=1 // pred_region
      %s14 = ssub.s32 128, 128
      %15 = vsyncadd [#allocation3], %s14
      %s17 = sshll.u32 [#allocation2], 4
      %s18 = int_to_ptr.vmem [resolvable:$true] %s17
      %20 = dma.hbm_to_vmem [thread:$0]  %s0, 128, %s18, [#allocation3]
    $region5: #{tpu_custom_call.1} parent=1 // pred_fallthru
      _
    // Predicated region
    $region6: #{tpu_custom_call.1} parent=1 // pred_check
      _
    $region7: #{tpu_custom_call.1} parent=1 // pred_check_branch
      %22 = sbr.rel (0) target = $region9
    $region8: #{tpu_custom_call.1} parent=1 // pred_region
      %s24 = ssub.s32 1664, 1664
      %25 = vsyncadd [#allocation6], %s24
      %s26 = sshll.u32 [#allocation5], 4
      %s27 = int_to_ptr.vmem [resolvable:$true] %s26
      %32 = dma.hbm_to_vmem [thread:$0]  %s1, 1664, %s27, [#allocation6], 128, 128, 8
    $region9: #{tpu_custom_call.1} parent=1 // pred_fallthru
      _
    // Predicated region
    $region10: #{tpu_custom_call.1} parent=1 // pred_check
      _
    $region11: #{tpu_custom_call.1} parent=1 // pred_check_branch
      %34 = sbr.rel (0) target = $region13
    $region12: #{tpu_custom_call.1} parent=1 // pred_region
      _
    $region13: #{tpu_custom_call.1} parent=1 // pred_fallthru
      _
    // Predicated region
    $region14: #{tpu_custom_call.1} parent=1 // pred_check
      _
    $region15: #{tpu_custom_call.1} parent=1 // pred_check_branch
      %36 = sbr.rel (0) target = $region17
    $region16: #{tpu_custom_call.1} parent=1 // pred_region
      %37 = dma.done [#allocation3], 128
    $region17: #{tpu_custom_call.1} parent=1 // pred_fallthru
      _
    // Predicated region
    $region18: #{tpu_custom_call.1} parent=1 // pred_check
      _
    $region19: #{tpu_custom_call.1} parent=1 // pred_check_branch
      %39 = sbr.rel (0) target = $region21
    $region20: #{tpu_custom_call.1} parent=1 // pred_region
      %40 = dma.done [#allocation6], 1664
    $region21: #{tpu_custom_call.1} parent=1 // pred_fallthru
      _
    %v41 = vld [vmem:[#allocation2] sm:$0xff]
    %v42 = vld [vmem:[#allocation5] sm:$0xff]
    %v43 = vld [vmem:[#allocation5 + $0x8] sm:$0xff]
    %v44 = vld [vmem:[#allocation5 + $0x10] sm:$0xff]
    %v45 = vld [vmem:[#allocation5 + $0x18] sm:$0xff]
    %v46 = vld [vmem:[#allocation5 + $0x20] sm:$0xff]
    %v47 = vld [vmem:[#allocation5 + $0x28] sm:$0xff]
    %v48 = vld [vmem:[#allocation5 + $0x30] sm:$0xff]
    %v49 = vld [vmem:[#allocation5 + $0x38] sm:$0xff]
    %v50 = vld [vmem:[#allocation5 + $0x40] sm:$0xff]
    %v51 = vld [vmem:[#allocation5 + $0x48] sm:$0xff]
    %v52 = vld [vmem:[#allocation5 + $0x50] sm:$0xff]
    %v53 = vld [vmem:[#allocation5 + $0x58] sm:$0xff]
    %v54 = vld [vmem:[#allocation5 + $0x60] sm:$0xf]
    %v55 = vld [vmem:[%s2] sm:$0x1]
    %v57 = vlaneseq
    %v58 = vshrl.u32 %v57, 7
    %v59 = vsub.s32 0, %v58
    %v60 = vrot.slane %v55, %v59
    %vm62 = vcmask 818176
    %v64 = vsel %vm62, %v41, 0
    %vm66 = vcmask 1043456
    %v68 = vsel %vm66, %v54, 0
    %70 = vmatprep.subr.mxu0 0.0
    %v71 = vand.u32 %v42, 4294901760
    %72 = vmatpush1.msra.mxu0 %v71
    %73 = vmatprep.subr.mxu0 0.0
    %v74 = vand.u32 %v43, 4294901760
    %75 = vmatpush1.msra.mxu0 %v74
    %76 = vmatprep.subr.mxu0 0.0
    %v77 = vand.u32 %v44, 4294901760
    %78 = vmatpush1.msra.mxu0 %v77
    %79 = vmatprep.subr.mxu0 0.0
    %v80 = vand.u32 %v45, 4294901760
    %81 = vmatpush1.msra.mxu0 %v80
    %82 = vmatprep.subr.mxu0 0.0
    %v83 = vand.u32 %v46, 4294901760
    %84 = vmatpush1.msra.mxu0 %v83
    %85 = vmatprep.subr.mxu0 0.0
    %v86 = vand.u32 %v47, 4294901760
    %87 = vmatpush1.msra.mxu0 %v86
    %88 = vmatprep.subr.mxu0 0.0
    %v89 = vand.u32 %v48, 4294901760
    %90 = vmatpush1.msra.mxu0 %v89
    %91 = vmatprep.subr.mxu0 0.0
    %v92 = vand.u32 %v49, 4294901760
    %93 = vmatpush1.msra.mxu0 %v92
    %94 = vmatprep.subr.mxu0 0.0
    %v95 = vand.u32 %v50, 4294901760
    %96 = vmatpush1.msra.mxu0 %v95
    %97 = vmatprep.subr.mxu0 0.0
    %v98 = vand.u32 %v51, 4294901760
    %99 = vmatpush1.msra.mxu0 %v98
    %100 = vmatprep.subr.mxu0 0.0
    %v101 = vand.u32 %v52, 4294901760
    %102 = vmatpush1.msra.mxu0 %v101
    %103 = vmatprep.subr.mxu0 0.0
    %v104 = vand.u32 %v53, 4294901760
    %105 = vmatpush1.msra.mxu0 %v104
    %106 = vmatprep.subr.mxu0 0.0
    %v107 = vand.u32 %v68, 4294901760
    %108 = vmatpush1.msra.mxu0 %v107
    %109 = vmatprep.subr.mxu0 0.0
    %110 = vmatpush1.msra.mxu0 0.0
    %111 = vmatprep.subr.mxu0 0.0
    %112 = vmatpush1.msra.mxu0 0.0
    %113 = vmatprep.subr.mxu0 0.0
    %114 = vmatpush1.msra.mxu0 0.0
    %115 = vmatprep.subr.mxu0 0.0
    %116 = vmatpush1.msra.mxu0 0.0
    %117 = vmatprep.subr.mxu0 0.0
    %118 = vmatpush1.msra.mxu0 0.0
    %119 = vmatprep.subr.mxu0 0.0
    %120 = vmatpush1.msra.mxu0 0.0
    %121 = vmatprep.subr.mxu0 0.0
    %122 = vmatpush1.msra.mxu0 0.0
    %123 = vmatprep.subr.mxu0 0.0
    %124 = vmatpush1.msra.mxu0 0.0
    %125 = vmatprep.subr.mxu0 0.0
    %126 = vmatpush1.msra.mxu0 0.0
    %127 = vmatprep.subr.mxu0 0.0
    %128 = vmatpush1.msra.mxu0 0.0
    %129 = vmatprep.subr.mxu0 0.0
    %130 = vmatpush1.msra.mxu0 0.0
    %131 = vmatprep.subr.mxu0 0.0
    %132 = vmatpush1.msra.mxu0 0.0
    %133 = vmatprep.subr.mxu0 0.0
    %134 = vmatpush1.msra.mxu0 0.0
    %135 = vmatprep.subr.mxu0 0.0
    %136 = vmatpush1.msra.mxu0 0.0
    %137 = vmatprep.subr.mxu0 0.0
    %138 = vmatpush1.msra.mxu0 0.0
    %139 = vmatprep.subr.mxu0 0.0
    %140 = vmatpush1.msra.mxu0 0.0
    %141 = vmatprep.subr.mxu0 0.0
    %142 = vmatpush1.msra.mxu0 0.0
    %143 = vmatprep.subr.mxu0 0.0
    %144 = vmatpush1.msra.mxu0 0.0
    %145 = vmatprep.subr.mxu0 0.0
    %146 = vmatpush1.msra.mxu0 0.0
    %147 = vmatprep.mubr.f32.mxu0 0.0
    %v148 = vand.u32 %v64, 4294901760
    %v149 = vsub.f32 %v64, %v148
    %v150 = vand.u32 %v149, 4294901760
    %v151 = vsub.f32 %v149, %v150
    %v152 = vand.u32 %v151, 4294901760
    %153 = vmatmul.mubr.f32.gmra.mrb[0].mxu0 %v152
    %v154 = vpop.f32.mrb[0].mxu0
    %v155 = vadd.f32 %v60, %v154
    %v156 = vpop.f32.mrb[0].mxu0
    %157 = vdwg.mxu0
    %158 = vmatprep.subr.mxu0 0.0
    %v159 = vand.u32 %v42, 4294901760
    %v160 = vsub.f32 %v42, %v159
    %v161 = vand.u32 %v160, 4294901760
    %v162 = vsub.f32 %v160, %v161
    %v163 = vand.u32 %v162, 4294901760
    %164 = vmatpush1.msra.mxu0 %v163
    %165 = vmatprep.subr.mxu0 0.0
    %v166 = vand.u32 %v43, 4294901760
    %v167 = vsub.f32 %v43, %v166
    %v168 = vand.u32 %v167, 4294901760
    %v169 = vsub.f32 %v167, %v168
    %v170 = vand.u32 %v169, 4294901760
    %171 = vmatpush1.msra.mxu0 %v170
    %172 = vmatprep.subr.mxu0 0.0
    %v173 = vand.u32 %v44, 4294901760
    %v174 = vsub.f32 %v44, %v173
    %v175 = vand.u32 %v174, 4294901760
    %v176 = vsub.f32 %v174, %v175
    %v177 = vand.u32 %v176, 4294901760
    %178 = vmatpush1.msra.mxu0 %v177
    %179 = vmatprep.subr.mxu0 0.0
    %v180 = vand.u32 %v45, 4294901760
    %v181 = vsub.f32 %v45, %v180
    %v182 = vand.u32 %v181, 4294901760
    %v183 = vsub.f32 %v181, %v182
    %v184 = vand.u32 %v183, 4294901760
    %185 = vmatpush1.msra.mxu0 %v184
    %186 = vmatprep.subr.mxu0 0.0
    %v187 = vand.u32 %v46, 4294901760
    %v188 = vsub.f32 %v46, %v187
    %v189 = vand.u32 %v188, 4294901760
    %v190 = vsub.f32 %v188, %v189
    %v191 = vand.u32 %v190, 4294901760
    %192 = vmatpush1.msra.mxu0 %v191
    %193 = vmatprep.subr.mxu0 0.0
    %v194 = vand.u32 %v47, 4294901760
    %v195 = vsub.f32 %v47, %v194
    %v196 = vand.u32 %v195, 4294901760
    %v197 = vsub.f32 %v195, %v196
    %v198 = vand.u32 %v197, 4294901760
    %199 = vmatpush1.msra.mxu0 %v198
    %200 = vmatprep.subr.mxu0 0.0
    %v201 = vand.u32 %v48, 4294901760
    %v202 = vsub.f32 %v48, %v201
    %v203 = vand.u32 %v202, 4294901760
    %v204 = vsub.f32 %v202, %v203
    %v205 = vand.u32 %v204, 4294901760
    %206 = vmatpush1.msra.mxu0 %v205
    %207 = vmatprep.subr.mxu0 0.0
    %v208 = vand.u32 %v49, 4294901760
    %v209 = vsub.f32 %v49, %v208
    %v210 = vand.u32 %v209, 4294901760
    %v211 = vsub.f32 %v209, %v210
    %v212 = vand.u32 %v211, 4294901760
    %213 = vmatpush1.msra.mxu0 %v212
    %214 = vmatprep.subr.mxu0 0.0
    %v215 = vand.u32 %v50, 4294901760
    %v216 = vsub.f32 %v50, %v215
    %v217 = vand.u32 %v216, 4294901760
    %v218 = vsub.f32 %v216, %v217
    %v219 = vand.u32 %v218, 4294901760
    %220 = vmatpush1.msra.mxu0 %v219
    %221 = vmatprep.subr.mxu0 0.0
    %v222 = vand.u32 %v51, 4294901760
    %v223 = vsub.f32 %v51, %v222
    %v224 = vand.u32 %v223, 4294901760
    %v225 = vsub.f32 %v223, %v224
    %v226 = vand.u32 %v225, 4294901760
    %227 = vmatpush1.msra.mxu0 %v226
    %228 = vmatprep.subr.mxu0 0.0
    %v229 = vand.u32 %v52, 4294901760
    %v230 = vsub.f32 %v52, %v229
    %v231 = vand.u32 %v230, 4294901760
    %v232 = vsub.f32 %v230, %v231
    %v233 = vand.u32 %v232, 4294901760
    %234 = vmatpush1.msra.mxu0 %v233
    %235 = vmatprep.subr.mxu0 0.0
    %v236 = vand.u32 %v53, 4294901760
    %v237 = vsub.f32 %v53, %v236
    %v238 = vand.u32 %v237, 4294901760
    %v239 = vsub.f32 %v237, %v238
    %v240 = vand.u32 %v239, 4294901760
    %241 = vmatpush1.msra.mxu0 %v240
    %242 = vmatprep.subr.mxu0 0.0
    %v243 = vand.u32 %v68, 4294901760
    %v244 = vsub.f32 %v68, %v243
    %v245 = vand.u32 %v244, 4294901760
    %v246 = vsub.f32 %v244, %v245
    %v247 = vand.u32 %v246, 4294901760
    %248 = vmatpush1.msra.mxu0 %v247
    %249 = vmatprep.subr.mxu0 0.0
    %250 = vmatpush1.msra.mxu0 0.0
    %251 = vmatprep.subr.mxu0 0.0
    %252 = vmatpush1.msra.mxu0 0.0
    %253 = vmatprep.subr.mxu0 0.0
    %254 = vmatpush1.msra.mxu0 0.0
    %255 = vmatprep.subr.mxu0 0.0
    %256 = vmatpush1.msra.mxu0 0.0
    %257 = vmatprep.subr.mxu0 0.0
    %258 = vmatpush1.msra.mxu0 0.0
    %259 = vmatprep.subr.mxu0 0.0
    %260 = vmatpush1.msra.mxu0 0.0
    %261 = vmatprep.subr.mxu0 0.0
    %262 = vmatpush1.msra.mxu0 0.0
    %263 = vmatprep.subr.mxu0 0.0
    %264 = vmatpush1.msra.mxu0 0.0
    %265 = vmatprep.subr.mxu0 0.0
    %266 = vmatpush1.msra.mxu0 0.0
    %267 = vmatprep.subr.mxu0 0.0
    %268 = vmatpush1.msra.mxu0 0.0
    %269 = vmatprep.subr.mxu0 0.0
    %270 = vmatpush1.msra.mxu0 0.0
    %271 = vmatprep.subr.mxu0 0.0
    %272 = vmatpush1.msra.mxu0 0.0
    %273 = vmatprep.subr.mxu0 0.0
    %274 = vmatpush1.msra.mxu0 0.0
    %275 = vmatprep.subr.mxu0 0.0
    %276 = vmatpush1.msra.mxu0 0.0
    %277 = vmatprep.subr.mxu0 0.0
    %278 = vmatpush1.msra.mxu0 0.0
    %279 = vmatprep.subr.mxu0 0.0
    %280 = vmatpush1.msra.mxu0 0.0
    %281 = vmatprep.subr.mxu0 0.0
    %282 = vmatpush1.msra.mxu0 0.0
    %283 = vmatprep.subr.mxu0 0.0
    %284 = vmatpush1.msra.mxu0 0.0
    %285 = vmatprep.subr.mxu0 0.0
    %286 = vmatpush1.msra.mxu0 0.0
    %287 = vmatprep.mubr.f32.mxu0 0.0
    %v288 = vand.u32 %v64, 4294901760
    %289 = vmatmul.mubr.f32.gmra.mrb[0].mxu0 %v288
    %v290 = vpop.f32.mrb[0].mxu0
    %v291 = vadd.f32 %v155, %v290
    %v292 = vpop.f32.mrb[0].mxu0
    %293 = vdwg.mxu0
    %294 = vmatprep.subr.mxu0 0.0
    %v295 = vand.u32 %v42, 4294901760
    %v296 = vsub.f32 %v42, %v295
    %297 = vmatpush1.msra.mxu0 %v296
    %298 = vmatprep.subr.mxu0 0.0
    %v299 = vand.u32 %v43, 4294901760
    %v300 = vsub.f32 %v43, %v299
    %301 = vmatpush1.msra.mxu0 %v300
    %302 = vmatprep.subr.mxu0 0.0
    %v303 = vand.u32 %v44, 4294901760
    %v304 = vsub.f32 %v44, %v303
    %305 = vmatpush1.msra.mxu0 %v304
    %306 = vmatprep.subr.mxu0 0.0
    %v307 = vand.u32 %v45, 4294901760
    %v308 = vsub.f32 %v45, %v307
    %309 = vmatpush1.msra.mxu0 %v308
    %310 = vmatprep.subr.mxu0 0.0
    %v311 = vand.u32 %v46, 4294901760
    %v312 = vsub.f32 %v46, %v311
    %313 = vmatpush1.msra.mxu0 %v312
    %314 = vmatprep.subr.mxu0 0.0
    %v315 = vand.u32 %v47, 4294901760
    %v316 = vsub.f32 %v47, %v315
    %317 = vmatpush1.msra.mxu0 %v316
    %318 = vmatprep.subr.mxu0 0.0
    %v319 = vand.u32 %v48, 4294901760
    %v320 = vsub.f32 %v48, %v319
    %321 = vmatpush1.msra.mxu0 %v320
    %322 = vmatprep.subr.mxu0 0.0
    %v323 = vand.u32 %v49, 4294901760
    %v324 = vsub.f32 %v49, %v323
    %325 = vmatpush1.msra.mxu0 %v324
    %326 = vmatprep.subr.mxu0 0.0
    %v327 = vand.u32 %v50, 4294901760
    %v328 = vsub.f32 %v50, %v327
    %329 = vmatpush1.msra.mxu0 %v328
    %330 = vmatprep.subr.mxu0 0.0
    %v331 = vand.u32 %v51, 4294901760
    %v332 = vsub.f32 %v51, %v331
    %333 = vmatpush1.msra.mxu0 %v332
    %334 = vmatprep.subr.mxu0 0.0
    %v335 = vand.u32 %v52, 4294901760
    %v336 = vsub.f32 %v52, %v335
    %337 = vmatpush1.msra.mxu0 %v336
    %338 = vmatprep.subr.mxu0 0.0
    %v339 = vand.u32 %v53, 4294901760
    %v340 = vsub.f32 %v53, %v339
    %341 = vmatpush1.msra.mxu0 %v340
    %342 = vmatprep.subr.mxu0 0.0
    %v343 = vand.u32 %v68, 4294901760
    %v344 = vsub.f32 %v68, %v343
    %345 = vmatpush1.msra.mxu0 %v344
    %346 = vmatprep.subr.mxu0 0.0
    %347 = vmatpush1.msra.mxu0 0.0
    %348 = vmatprep.subr.mxu0 0.0
    %349 = vmatpush1.msra.mxu0 0.0
    %350 = vmatprep.subr.mxu0 0.0
    %351 = vmatpush1.msra.mxu0 0.0
    %352 = vmatprep.subr.mxu0 0.0
    %353 = vmatpush1.msra.mxu0 0.0
    %354 = vmatprep.subr.mxu0 0.0
    %355 = vmatpush1.msra.mxu0 0.0
    %356 = vmatprep.subr.mxu0 0.0
    %357 = vmatpush1.msra.mxu0 0.0
    %358 = vmatprep.subr.mxu0 0.0
    %359 = vmatpush1.msra.mxu0 0.0
    %360 = vmatprep.subr.mxu0 0.0
    %361 = vmatpush1.msra.mxu0 0.0
    %362 = vmatprep.subr.mxu0 0.0
    %363 = vmatpush1.msra.mxu0 0.0
    %364 = vmatprep.subr.mxu0 0.0
    %365 = vmatpush1.msra.mxu0 0.0
    %366 = vmatprep.subr.mxu0 0.0
    %367 = vmatpush1.msra.mxu0 0.0
    %368 = vmatprep.subr.mxu0 0.0
    %369 = vmatpush1.msra.mxu0 0.0
    %370 = vmatprep.subr.mxu0 0.0
    %371 = vmatpush1.msra.mxu0 0.0
    %372 = vmatprep.subr.mxu0 0.0
    %373 = vmatpush1.msra.mxu0 0.0
    %374 = vmatprep.subr.mxu0 0.0
    %375 = vmatpush1.msra.mxu0 0.0
    %376 = vmatprep.subr.mxu0 0.0
    %377 = vmatpush1.msra.mxu0 0.0
    %378 = vmatprep.subr.mxu0 0.0
    %379 = vmatpush1.msra.mxu0 0.0
    %380 = vmatprep.subr.mxu0 0.0
    %381 = vmatpush1.msra.mxu0 0.0
    %382 = vmatprep.subr.mxu0 0.0
    %383 = vmatpush1.msra.mxu0 0.0
    %384 = vmatprep.mubr.f32.mxu0 0.0
    %v385 = vand.u32 %v64, 4294901760
    %v386 = vsub.f32 %v64, %v385
    %387 = vmatmul.mubr.f32.gmra.mrb[0].mxu0 %v386
    %v388 = vpop.f32.mrb[0].mxu0
    %v389 = vadd.f32 %v291, %v388
    %v390 = vpop.f32.mrb[0].mxu0
    %391 = vdwg.mxu0
    %392 = vmatprep.subr.mxu0 0.0
    %v393 = vand.u32 %v42, 4294901760
    %394 = vmatpush1.msra.mxu0 %v393
    %395 = vmatprep.subr.mxu0 0.0
    %v396 = vand.u32 %v43, 4294901760
    %397 = vmatpush1.msra.mxu0 %v396
    %398 = vmatprep.subr.mxu0 0.0
    %v399 = vand.u32 %v44, 4294901760
    %400 = vmatpush1.msra.mxu0 %v399
    %401 = vmatprep.subr.mxu0 0.0
    %v402 = vand.u32 %v45, 4294901760
    %403 = vmatpush1.msra.mxu0 %v402
    %404 = vmatprep.subr.mxu0 0.0
    %v405 = vand.u32 %v46, 4294901760
    %406 = vmatpush1.msra.mxu0 %v405
    %407 = vmatprep.subr.mxu0 0.0
    %v408 = vand.u32 %v47, 4294901760
    %409 = vmatpush1.msra.mxu0 %v408
    %410 = vmatprep.subr.mxu0 0.0
    %v411 = vand.u32 %v48, 4294901760
    %412 = vmatpush1.msra.mxu0 %v411
    %413 = vmatprep.subr.mxu0 0.0
    %v414 = vand.u32 %v49, 4294901760
    %415 = vmatpush1.msra.mxu0 %v414
    %416 = vmatprep.subr.mxu0 0.0
    %v417 = vand.u32 %v50, 4294901760
    %418 = vmatpush1.msra.mxu0 %v417
    %419 = vmatprep.subr.mxu0 0.0
    %v420 = vand.u32 %v51, 4294901760
    %421 = vmatpush1.msra.mxu0 %v420
    %422 = vmatprep.subr.mxu0 0.0
    %v423 = vand.u32 %v52, 4294901760
    %424 = vmatpush1.msra.mxu0 %v423
    %425 = vmatprep.subr.mxu0 0.0
    %v426 = vand.u32 %v53, 4294901760
    %427 = vmatpush1.msra.mxu0 %v426
    %428 = vmatprep.subr.mxu0 0.0
    %v429 = vand.u32 %v68, 4294901760
    %430 = vmatpush1.msra.mxu0 %v429
    %431 = vmatprep.subr.mxu0 0.0
    %432 = vmatpush1.msra.mxu0 0.0
    %433 = vmatprep.subr.mxu0 0.0
    %434 = vmatpush1.msra.mxu0 0.0
    %435 = vmatprep.subr.mxu0 0.0
    %436 = vmatpush1.msra.mxu0 0.0
    %437 = vmatprep.subr.mxu0 0.0
    %438 = vmatpush1.msra.mxu0 0.0
    %439 = vmatprep.subr.mxu0 0.0
    %440 = vmatpush1.msra.mxu0 0.0
    %441 = vmatprep.subr.mxu0 0.0
    %442 = vmatpush1.msra.mxu0 0.0
    %443 = vmatprep.subr.mxu0 0.0
    %444 = vmatpush1.msra.mxu0 0.0
    %445 = vmatprep.subr.mxu0 0.0
    %446 = vmatpush1.msra.mxu0 0.0
    %447 = vmatprep.subr.mxu0 0.0
    %448 = vmatpush1.msra.mxu0 0.0
    %449 = vmatprep.subr.mxu0 0.0
    %450 = vmatpush1.msra.mxu0 0.0
    %451 = vmatprep.subr.mxu0 0.0
    %452 = vmatpush1.msra.mxu0 0.0
    %453 = vmatprep.subr.mxu0 0.0
    %454 = vmatpush1.msra.mxu0 0.0
    %455 = vmatprep.subr.mxu0 0.0
    %456 = vmatpush1.msra.mxu0 0.0
    %457 = vmatprep.subr.mxu0 0.0
    %458 = vmatpush1.msra.mxu0 0.0
    %459 = vmatprep.subr.mxu0 0.0
    %460 = vmatpush1.msra.mxu0 0.0
    %461 = vmatprep.subr.mxu0 0.0
    %462 = vmatpush1.msra.mxu0 0.0
    %463 = vmatprep.subr.mxu0 0.0
    %464 = vmatpush1.msra.mxu0 0.0
    %465 = vmatprep.subr.mxu0 0.0
    %466 = vmatpush1.msra.mxu0 0.0
    %467 = vmatprep.subr.mxu0 0.0
    %468 = vmatpush1.msra.mxu0 0.0
    %469 = vmatprep.mubr.f32.mxu0 0.0
    %v470 = vand.u32 %v64, 4294901760
    %v471 = vsub.f32 %v64, %v470
    %v472 = vand.u32 %v471, 4294901760
    %473 = vmatmul.mubr.f32.gmra.mrb[0].mxu0 %v472
    %v474 = vpop.f32.mrb[0].mxu0
    %v475 = vadd.f32 %v389, %v474
    %v476 = vpop.f32.mrb[0].mxu0
    %477 = vdwg.mxu0
    %478 = vmatprep.subr.mxu0 0.0
    %v479 = vand.u32 %v42, 4294901760
    %v480 = vsub.f32 %v42, %v479
    %v481 = vand.u32 %v480, 4294901760
    %482 = vmatpush1.msra.mxu0 %v481
    %483 = vmatprep.subr.mxu0 0.0
    %v484 = vand.u32 %v43, 4294901760
    %v485 = vsub.f32 %v43, %v484
    %v486 = vand.u32 %v485, 4294901760
    %487 = vmatpush1.msra.mxu0 %v486
    %488 = vmatprep.subr.mxu0 0.0
    %v489 = vand.u32 %v44, 4294901760
    %v490 = vsub.f32 %v44, %v489
    %v491 = vand.u32 %v490, 4294901760
    %492 = vmatpush1.msra.mxu0 %v491
    %493 = vmatprep.subr.mxu0 0.0
    %v494 = vand.u32 %v45, 4294901760
    %v495 = vsub.f32 %v45, %v494
    %v496 = vand.u32 %v495, 4294901760
    %497 = vmatpush1.msra.mxu0 %v496
    %498 = vmatprep.subr.mxu0 0.0
    %v499 = vand.u32 %v46, 4294901760
    %v500 = vsub.f32 %v46, %v499
    %v501 = vand.u32 %v500, 4294901760
    %502 = vmatpush1.msra.mxu0 %v501
    %503 = vmatprep.subr.mxu0 0.0
    %v504 = vand.u32 %v47, 4294901760
    %v505 = vsub.f32 %v47, %v504
    %v506 = vand.u32 %v505, 4294901760
    %507 = vmatpush1.msra.mxu0 %v506
    %508 = vmatprep.subr.mxu0 0.0
    %v509 = vand.u32 %v48, 4294901760
    %v510 = vsub.f32 %v48, %v509
    %v511 = vand.u32 %v510, 4294901760
    %512 = vmatpush1.msra.mxu0 %v511
    %513 = vmatprep.subr.mxu0 0.0
    %v514 = vand.u32 %v49, 4294901760
    %v515 = vsub.f32 %v49, %v514
    %v516 = vand.u32 %v515, 4294901760
    %517 = vmatpush1.msra.mxu0 %v516
    %518 = vmatprep.subr.mxu0 0.0
    %v519 = vand.u32 %v50, 4294901760
    %v520 = vsub.f32 %v50, %v519
    %v521 = vand.u32 %v520, 4294901760
    %522 = vmatpush1.msra.mxu0 %v521
    %523 = vmatprep.subr.mxu0 0.0
    %v524 = vand.u32 %v51, 4294901760
    %v525 = vsub.f32 %v51, %v524
    %v526 = vand.u32 %v525, 4294901760
    %527 = vmatpush1.msra.mxu0 %v526
    %528 = vmatprep.subr.mxu0 0.0
    %v529 = vand.u32 %v52, 4294901760
    %v530 = vsub.f32 %v52, %v529
    %v531 = vand.u32 %v530, 4294901760
    %532 = vmatpush1.msra.mxu0 %v531
    %533 = vmatprep.subr.mxu0 0.0
    %v534 = vand.u32 %v53, 4294901760
    %v535 = vsub.f32 %v53, %v534
    %v536 = vand.u32 %v535, 4294901760
    %537 = vmatpush1.msra.mxu0 %v536
    %538 = vmatprep.subr.mxu0 0.0
    %v539 = vand.u32 %v68, 4294901760
    %v540 = vsub.f32 %v68, %v539
    %v541 = vand.u32 %v540, 4294901760
    %542 = vmatpush1.msra.mxu0 %v541
    %543 = vmatprep.subr.mxu0 0.0
    %544 = vmatpush1.msra.mxu0 0.0
    %545 = vmatprep.subr.mxu0 0.0
    %546 = vmatpush1.msra.mxu0 0.0
    %547 = vmatprep.subr.mxu0 0.0
    %548 = vmatpush1.msra.mxu0 0.0
    %549 = vmatprep.subr.mxu0 0.0
    %550 = vmatpush1.msra.mxu0 0.0
    %551 = vmatprep.subr.mxu0 0.0
    %552 = vmatpush1.msra.mxu0 0.0
    %553 = vmatprep.subr.mxu0 0.0
    %554 = vmatpush1.msra.mxu0 0.0
    %555 = vmatprep.subr.mxu0 0.0
    %556 = vmatpush1.msra.mxu0 0.0
    %557 = vmatprep.subr.mxu0 0.0
    %558 = vmatpush1.msra.mxu0 0.0
    %559 = vmatprep.subr.mxu0 0.0
    %560 = vmatpush1.msra.mxu0 0.0
    %561 = vmatprep.subr.mxu0 0.0
    %562 = vmatpush1.msra.mxu0 0.0
    %563 = vmatprep.subr.mxu0 0.0
    %564 = vmatpush1.msra.mxu0 0.0
    %565 = vmatprep.subr.mxu0 0.0
    %566 = vmatpush1.msra.mxu0 0.0
    %567 = vmatprep.subr.mxu0 0.0
    %568 = vmatpush1.msra.mxu0 0.0
    %569 = vmatprep.subr.mxu0 0.0
    %570 = vmatpush1.msra.mxu0 0.0
    %571 = vmatprep.subr.mxu0 0.0
    %572 = vmatpush1.msra.mxu0 0.0
    %573 = vmatprep.subr.mxu0 0.0
    %574 = vmatpush1.msra.mxu0 0.0
    %575 = vmatprep.subr.mxu0 0.0
    %576 = vmatpush1.msra.mxu0 0.0
    %577 = vmatprep.subr.mxu0 0.0
    %578 = vmatpush1.msra.mxu0 0.0
    %579 = vmatprep.subr.mxu0 0.0
    %580 = vmatpush1.msra.mxu0 0.0
    %581 = vmatprep.mubr.f32.mxu0 0.0
    %v582 = vand.u32 %v64, 4294901760
    %583 = vmatmul.mubr.f32.gmra.mrb[0].mxu0 %v582
    %v584 = vpop.f32.mrb[0].mxu0
    %v585 = vadd.f32 %v475, %v584
    %v586 = vpop.f32.mrb[0].mxu0
    %587 = vdwg.mxu0
    %588 = vmatprep.subr.mxu0 0.0
    %v589 = vand.u32 %v42, 4294901760
    %590 = vmatpush1.msra.mxu0 %v589
    %591 = vmatprep.subr.mxu0 0.0
    %v592 = vand.u32 %v43, 4294901760
    %593 = vmatpush1.msra.mxu0 %v592
    %594 = vmatprep.subr.mxu0 0.0
    %v595 = vand.u32 %v44, 4294901760
    %596 = vmatpush1.msra.mxu0 %v595
    %597 = vmatprep.subr.mxu0 0.0
    %v598 = vand.u32 %v45, 4294901760
    %599 = vmatpush1.msra.mxu0 %v598
    %600 = vmatprep.subr.mxu0 0.0
    %v601 = vand.u32 %v46, 4294901760
    %602 = vmatpush1.msra.mxu0 %v601
    %603 = vmatprep.subr.mxu0 0.0
    %v604 = vand.u32 %v47, 4294901760
    %605 = vmatpush1.msra.mxu0 %v604
    %606 = vmatprep.subr.mxu0 0.0
    %v607 = vand.u32 %v48, 4294901760
    %608 = vmatpush1.msra.mxu0 %v607
    %609 = vmatprep.subr.mxu0 0.0
    %v610 = vand.u32 %v49, 4294901760
    %611 = vmatpush1.msra.mxu0 %v610
    %612 = vmatprep.subr.mxu0 0.0
    %v613 = vand.u32 %v50, 4294901760
    %614 = vmatpush1.msra.mxu0 %v613
    %615 = vmatprep.subr.mxu0 0.0
    %v616 = vand.u32 %v51, 4294901760
    %617 = vmatpush1.msra.mxu0 %v616
    %618 = vmatprep.subr.mxu0 0.0
    %v619 = vand.u32 %v52, 4294901760
    %620 = vmatpush1.msra.mxu0 %v619
    %621 = vmatprep.subr.mxu0 0.0
    %v622 = vand.u32 %v53, 4294901760
    %623 = vmatpush1.msra.mxu0 %v622
    %624 = vmatprep.subr.mxu0 0.0
    %v625 = vand.u32 %v68, 4294901760
    %626 = vmatpush1.msra.mxu0 %v625
    %627 = vmatprep.subr.mxu0 0.0
    %628 = vmatpush1.msra.mxu0 0.0
    %629 = vmatprep.subr.mxu0 0.0
    %630 = vmatpush1.msra.mxu0 0.0
    %631 = vmatprep.subr.mxu0 0.0
    %632 = vmatpush1.msra.mxu0 0.0
    %633 = vmatprep.subr.mxu0 0.0
    %634 = vmatpush1.msra.mxu0 0.0
    %635 = vmatprep.subr.mxu0 0.0
    %636 = vmatpush1.msra.mxu0 0.0
    %637 = vmatprep.subr.mxu0 0.0
    %638 = vmatpush1.msra.mxu0 0.0
    %639 = vmatprep.subr.mxu0 0.0
    %640 = vmatpush1.msra.mxu0 0.0
    %641 = vmatprep.subr.mxu0 0.0
    %642 = vmatpush1.msra.mxu0 0.0
    %643 = vmatprep.subr.mxu0 0.0
    %644 = vmatpush1.msra.mxu0 0.0
    %645 = vmatprep.subr.mxu0 0.0
    %646 = vmatpush1.msra.mxu0 0.0
    %647 = vmatprep.subr.mxu0 0.0
    %648 = vmatpush1.msra.mxu0 0.0
    %649 = vmatprep.subr.mxu0 0.0
    %650 = vmatpush1.msra.mxu0 0.0
    %651 = vmatprep.subr.mxu0 0.0
    %652 = vmatpush1.msra.mxu0 0.0
    %653 = vmatprep.subr.mxu0 0.0
    %654 = vmatpush1.msra.mxu0 0.0
    %655 = vmatprep.subr.mxu0 0.0
    %656 = vmatpush1.msra.mxu0 0.0
    %657 = vmatprep.subr.mxu0 0.0
    %658 = vmatpush1.msra.mxu0 0.0
    %659 = vmatprep.subr.mxu0 0.0
    %660 = vmatpush1.msra.mxu0 0.0
    %661 = vmatprep.subr.mxu0 0.0
    %662 = vmatpush1.msra.mxu0 0.0
    %663 = vmatprep.subr.mxu0 0.0
    %664 = vmatpush1.msra.mxu0 0.0
    %665 = vmatprep.mubr.f32.mxu0 0.0
    %v666 = vand.u32 %v64, 4294901760
    %667 = vmatmul.mubr.f32.gmra.mrb[0].mxu0 %v666
    %v668 = vpop.f32.mrb[0].mxu0
    %v669 = vadd.f32 %v585, %v668
    %v670 = vpop.f32.mrb[0].mxu0
    %671 = vdwg.mxu0
    %v672 = vmul.f32 %v669, 0.5
    %v673 = vtanh.pop %v672
    %v674 = vmul.f32 %v673, 0.5
    %v675 = vadd.f32 %v674, 0.5
    %676 = vst [vmem:[#allocation7] sm:$0xff] %v675
    // Predicated region
    $region22: #{tpu_custom_call.1} parent=1 // pred_check
      _
    $region23: #{tpu_custom_call.1} parent=1 // pred_check_branch
      %678 = sbr.rel (0) target = $region25
    $region24: #{tpu_custom_call.1} parent=1 // pred_region
      %s680 = ssub.s32 128, 128
      %681 = vsyncadd [#allocation4], %s680
      %s683 = sshll.u32 [#allocation7], 4
      %s684 = int_to_ptr.vmem [resolvable:$true] %s683
      %686 = dma.vmem_to_hbm [thread:$0]  %s684, 128, %s3, [#allocation4]
    $region25: #{tpu_custom_call.1} parent=1 // pred_fallthru
      _
    // Predicated region
    $region26: #{tpu_custom_call.1} parent=1 // pred_check
      _
    $region27: #{tpu_custom_call.1} parent=1 // pred_check_branch
      %688 = sbr.rel (0) target = $region29
    $region28: #{tpu_custom_call.1} parent=1 // pred_region
      %689 = dma.done [#allocation4], 128
    $region29: #{tpu_custom_call.1} parent=1 // pred_fallthru
      _
    %690 = vsyncpa [#allocation3], 1
    %691 = vsyncpa [#allocation6], 1
    %692 = vsyncpa [#allocation4], 1

</llo_original>
